<compile_context>
chip_gen: v7x
topology: tpu7x:2x2x1
jax: 0.10.0
libtpu: 0.0.40
codegen_flags: <defaults>
</compile_context>

<pallas_src>
import jax
import jax.numpy as jnp
from jax.experimental import pallas as pl
from jax.experimental.pallas import tpu as pltpu


def _round_up(x, m):
    return (x + m - 1) // m * m


def _mlp_kernel(x_ref, w1_ref, b1_ref, w2_ref, b2_ref, w3_ref, b3_ref, o_ref):
    # x tile: (tb, 60) f32, streamed / double-buffered by the Pallas pipeline.
    # Cast to bf16 here (VPU has huge slack) instead of a separate wrapper-side HBM pass.
    x = x_ref[...].astype(jnp.bfloat16)

    # Layer 1: bf16 @ bf16 on the MXU, f32 accumulation; activations stay f32 (v5e-safe).
    h1 = jnp.dot(x, w1_ref[...], preferred_element_type=jnp.float32) + b1_ref[...]
    h1 = jnp.maximum(h1, 0.0)

    # Layer 2: explicit bf16 LHS so the MXU runs at native bf16 rate (avoids a silent f32
    # upcast of the resident bf16 w2) and h1's vreg/VMEM footprint halves.
    h2 = jnp.dot(h1.astype(jnp.bfloat16), w2_ref[...],
                 preferred_element_type=jnp.float32) + b2_ref[...]
    h2 = jnp.maximum(h2, 0.0)

    # Layer 3: a (tb,64) @ (64,1) matmul would waste 127/128 of the MXU result width.
    # Do it on the VPU (elementwise multiply) + XLU (lane reduce) instead, and emit a
    # lane-dense (tb//128, 128) slab so the final store is unmasked / full-width.
    slab_rows = o_ref.shape[0]                            # tb // 128
    h2_3d = h2.reshape(slab_rows, 128, h2.shape[-1])      # leading-dim split: layout no-op
    w3_row = w3_ref[...].reshape(1, 1, -1)                # (1, 1, 64) f32
    out = jnp.sum(h2_3d * w3_row, axis=-1) + b3_ref[0]    # (tb//128, 128) f32
    o_ref[...] = out.astype(o_ref.dtype)


def prepare_params(params):
    """One-time dtype/layout prep (hoisted out of the forward call):
    bf16 MXU weights, f32 biases, w3 as a (1,64) f32 row, b3 as a length-1 SMEM scalar."""
    return {
        "w1": params["w1"].astype(jnp.bfloat16),              # (60, 128)
        "b1": params["b1"].astype(jnp.float32).reshape(1, 128),
        "w2": params["w2"].astype(jnp.bfloat16),               # (128, 64)
        "b2": params["b2"].astype(jnp.float32).reshape(1, 64),
        "w3": params["w3"].astype(jnp.float32).reshape(1, 64),  # VPU row, keep f32
        "b3": params["b3"].reshape(-1).astype(jnp.float32),      # (1,) scalar -> SMEM
    }


def stock_predictor_forward(x, kparams, *, block_b=4096):
    """x: (B, 60) float; kparams from prepare_params. Returns (B, 1) float32."""
    B, F = x.shape
    assert F == 60, F

    # Pad the batch only up to a multiple of 128 (needed for the lane-dense output slab).
    # Padding rows produce bias-only garbage that the final [:B] slice removes.
    b_pad = _round_up(B, 128)
    x = x.astype(jnp.float32)          # stream f32; bf16 cast happens inside the kernel
    if b_pad != B:
        x = jnp.pad(x, ((0, b_pad - B), (0, 0)))

    # Tile choice:
    #  * multiple of 1024 so the out-slab block rows (tb//128) are a multiple of 8
    #    (unless a single block covers the whole padded batch, which is always legal),
    #  * at most ~half the batch so v7x's two TensorCores both get grid steps,
    #  * tb=4096 keeps per-step VMEM (~7-8 MiB) under v5e's 16 MiB scoped default while
    #    amortizing the ~0.35us per-grid-step overhead on all generations.
    tb = min(_round_up(block_b, 1024), _round_up(pl.cdiv(b_pad, 2), 1024))
    if tb >= b_pad:
        tb = b_pad                     # single full-extent block
    n_blk = pl.cdiv(b_pad, tb)         # partial final block allowed (Pallas masks it)
    slab_rows = tb // 128

    out_slab = pl.pallas_call(
        _mlp_kernel,
        out_shape=jax.ShapeDtypeStruct((b_pad // 128, 128), jnp.float32),
        grid=(n_blk,),
        in_specs=[
            pl.BlockSpec((tb, 60), lambda i: (i, 0)),            # x: streamed per tile (f32)
            pl.BlockSpec((60, 128), lambda i: (0, 0)),           # w1: VMEM-resident bf16
            pl.BlockSpec((1, 128), lambda i: (0, 0)),            # b1: resident
            pl.BlockSpec((128, 64), lambda i: (0, 0)),           # w2: resident bf16
            pl.BlockSpec((1, 64), lambda i: (0, 0)),             # b2: resident
            pl.BlockSpec((1, 64), lambda i: (0, 0)),             # w3 row: resident f32
            pl.BlockSpec(memory_space=pltpu.MemorySpace.SMEM),   # b3 scalar in SMEM
        ],
        out_specs=pl.BlockSpec((slab_rows, 128), lambda i: (i, 0)),
        compiler_params=pltpu.CompilerParams(
            dimension_semantics=("parallel",),                   # megacore split on v7x
        ),
    )(x, kparams["w1"], kparams["b1"], kparams["w2"], kparams["b2"],
      kparams["w3"], kparams["b3"])

    # Lane-dense (b_pad//128, 128) slab -> (B, 1) column, matching nn.Linear(64, 1).
    return out_slab.reshape(b_pad, 1)[:B]


def init_params(key):
    """Shapes match the PyTorch module. nn.Linear(in, out) stores weight (out, in);
    we keep the transpose (in, out) so the kernel computes x @ W + b.
    w3 is stored as a (1, 64) row for the VPU reduction."""
    ks = jax.random.split(key, 6)

    def linear(kw, kb, fan_in, fan_out):
        bound = 1.0 / jnp.sqrt(fan_in)
        w = jax.random.uniform(kw, (fan_in, fan_out), jnp.float32, -bound, bound)
        b = jax.random.uniform(kb, (1, fan_out), jnp.float32, -bound, bound)
        return w, b

    w1, b1 = linear(ks[0], ks[1], 60, 128)
    w2, b2 = linear(ks[2], ks[3], 128, 64)
    w3, b3 = linear(ks[4], ks[5], 64, 1)
    return {"w1": w1, "b1": b1, "w2": w2, "b2": b2, "w3": w3.T, "b3": b3}


def reference_forward(x, p):
    h1 = jnp.maximum(x @ p["w1"] + p["b1"], 0.0)
    h2 = jnp.maximum(h1 @ p["w2"] + p["b2"], 0.0)
    return h2 @ p["w3"].T + p["b3"]


if __name__ == "__main__":
    key = jax.random.PRNGKey(0)
    k_params, k_x = jax.random.split(key)

    params = init_params(k_params)
    kparams = prepare_params(params)                 # one-time dtype prep (not per call)
    x = jax.random.normal(k_x, (8, 60), jnp.float32)  # small demo batch, 60 features

    out = stock_predictor_forward(x, kparams)
    out = jax.block_until_ready(out)

    ref = reference_forward(x, params)
    assert out.shape == (8, 1), out.shape
    # bf16 weights/matmuls in the kernel vs f32 reference -> looser (documented) tolerance.
    err = jnp.max(jnp.abs(out - ref))
    assert jnp.allclose(out, ref, atol=2e-2, rtol=2e-2), f"mismatch vs reference, max abs err={err}"

    print("KERNEL_OK")
</pallas_src>

<mosaic_0001>
module attributes {stable_mosaic.version = 11 : i64} {
  func.func @_mlp_kernel(%arg0: i32, %arg1: memref<128x60xf32, #tpu.memory_space<vmem>>, %arg2: memref<60x128xbf16, #tpu.memory_space<vmem>>, %arg3: memref<1x128xf32, #tpu.memory_space<vmem>>, %arg4: memref<128x64xbf16, #tpu.memory_space<vmem>>, %arg5: memref<1x64xf32, #tpu.memory_space<vmem>>, %arg6: memref<1x64xf32, #tpu.memory_space<vmem>>, %arg7: memref<1xf32, #tpu.memory_space<smem>>, %arg8: memref<1x128xf32, #tpu.memory_space<vmem>>) attributes {dimension_semantics = [#tpu.dimension_semantics<parallel>], iteration_bounds = array<i64: 1>, scalar_prefetch = 0 : i64, scratch_operands = 0 : i64, tpu.core_type = #tpu.core_type<tc>, window_params = [{transform_indices = @transform_0, window_bounds = array<i64: 128, 60>}, {pipeline_mode = #tpu.pipeline_mode<synchronous>, transform_indices = @transform_1, window_bounds = array<i64: 60, 128>}, {pipeline_mode = #tpu.pipeline_mode<synchronous>, transform_indices = @transform_2, window_bounds = array<i64: 1, 128>}, {pipeline_mode = #tpu.pipeline_mode<synchronous>, transform_indices = @transform_3, window_bounds = array<i64: 128, 64>}, {pipeline_mode = #tpu.pipeline_mode<synchronous>, transform_indices = @transform_4, window_bounds = array<i64: 1, 64>}, {pipeline_mode = #tpu.pipeline_mode<synchronous>, transform_indices = @transform_5, window_bounds = array<i64: 1, 64>}, {transform_indices = @transform_6, window_bounds = array<i64: 1>}, {transform_indices = @transform_7, window_bounds = array<i64: 1, 128>}]} {
    %c0 = arith.constant 0 : index
    %c0_0 = arith.constant 0 : index
    %0 = vector.load %arg1[%c0, %c0_0] : memref<128x60xf32, #tpu.memory_space<vmem>>, vector<128x60xf32>
    %1 = arith.truncf %0 : vector<128x60xf32> to vector<128x60xbf16>
    %c0_1 = arith.constant 0 : index
    %c0_2 = arith.constant 0 : index
    %2 = vector.load %arg2[%c0_1, %c0_2] : memref<60x128xbf16, #tpu.memory_space<vmem>>, vector<60x128xbf16>
    %cst = arith.constant dense<0.000000e+00> : vector<128x128xf32>
    %3 = tpu.matmul %1, %2, %cst {dimension_numbers = #tpu.dot_dimension_numbers<[1], [0], [0], [1], [0, 0, 1, 1], [], []>} : vector<128x60xbf16>, vector<60x128xbf16>, vector<128x128xf32> -> vector<128x128xf32>
    %c0_3 = arith.constant 0 : index
    %c0_4 = arith.constant 0 : index
    %4 = vector.load %arg3[%c0_3, %c0_4] : memref<1x128xf32, #tpu.memory_space<vmem>>, vector<1x128xf32>
    %5 = vector.broadcast %4 : vector<1x128xf32> to vector<128x128xf32>
    %6 = arith.addf %3, %5 : vector<128x128xf32>
    %cst_5 = arith.constant 0.000000e+00 : f32
    %7 = vector.broadcast %cst_5 : f32 to vector<128x128xf32>
    %8 = arith.maximumf %6, %7 : vector<128x128xf32>
    %9 = arith.truncf %8 : vector<128x128xf32> to vector<128x128xbf16>
    %c0_6 = arith.constant 0 : index
    %c0_7 = arith.constant 0 : index
    %10 = vector.load %arg4[%c0_6, %c0_7] : memref<128x64xbf16, #tpu.memory_space<vmem>>, vector<128x64xbf16>
    %cst_8 = arith.constant dense<0.000000e+00> : vector<128x64xf32>
    %11 = tpu.matmul %9, %10, %cst_8 {dimension_numbers = #tpu.dot_dimension_numbers<[1], [0], [0], [1], [0, 0, 1, 1], [], []>} : vector<128x128xbf16>, vector<128x64xbf16>, vector<128x64xf32> -> vector<128x64xf32>
    %c0_9 = arith.constant 0 : index
    %c0_10 = arith.constant 0 : index
    %12 = vector.load %arg5[%c0_9, %c0_10] : memref<1x64xf32, #tpu.memory_space<vmem>>, vector<1x64xf32>
    %13 = vector.broadcast %12 : vector<1x64xf32> to vector<128x64xf32>
    %14 = arith.addf %11, %13 : vector<128x64xf32>
    %cst_11 = arith.constant 0.000000e+00 : f32
    %15 = vector.broadcast %cst_11 : f32 to vector<128x64xf32>
    %16 = arith.maximumf %14, %15 : vector<128x64xf32>
    %17 = vector.shape_cast %16 : vector<128x64xf32> to vector<1x128x64xf32>
    %c0_12 = arith.constant 0 : index
    %c0_13 = arith.constant 0 : index
    %18 = vector.load %arg6[%c0_12, %c0_13] : memref<1x64xf32, #tpu.memory_space<vmem>>, vector<1x64xf32>
    %19 = vector.shape_cast %18 : vector<1x64xf32> to vector<1x1x64xf32>
    %20 = vector.broadcast %19 : vector<1x1x64xf32> to vector<1x128x64xf32>
    %21 = arith.mulf %17, %20 : vector<1x128x64xf32>
    %cst_14 = arith.constant dense<0.000000e+00> : vector<1x128xf32>
    %22 = vector.multi_reduction <add>, %21, %cst_14 [2] : vector<1x128x64xf32> to vector<1x128xf32>
    %c0_15 = arith.constant 0 : index
    %23 = memref.load %arg7[%c0_15] : memref<1xf32, #tpu.memory_space<smem>>
    %24 = vector.broadcast %23 : f32 to vector<1x128xf32>
    %25 = arith.addf %22, %24 : vector<1x128xf32>
    %c0_16 = arith.constant 0 : index
    %c0_17 = arith.constant 0 : index
    %26 = vector.load %arg8[%c0_16, %c0_17] : memref<1x128xf32, #tpu.memory_space<vmem>>, vector<1x128xf32>
    tpu.vector_store %arg8[%c0_16, %c0_17], %25 {strides = array<i32>} : memref<1x128xf32, #tpu.memory_space<vmem>>, vector<1x128xf32>,
    return
  }
  func.func @transform_0(%arg0: i32) -> (i32, i32) {
    %c0_i32 = arith.constant 0 : i32
    %c0_i32_0 = arith.constant 0 : i32
    return %arg0, %c0_i32 : i32, i32
  }
  func.func @transform_1(%arg0: i32) -> (i32, i32) {
    %c0_i32 = arith.constant 0 : i32
    %c0_i32_0 = arith.constant 0 : i32
    %c0_i32_1 = arith.constant 0 : i32
    return %c0_i32, %c0_i32_0 : i32, i32
  }
  func.func @transform_2(%arg0: i32) -> (i32, i32) {
    %c0_i32 = arith.constant 0 : i32
    %c0_i32_0 = arith.constant 0 : i32
    %c0_i32_1 = arith.constant 0 : i32
    return %c0_i32, %c0_i32_0 : i32, i32
  }
  func.func @transform_3(%arg0: i32) -> (i32, i32) {
    %c0_i32 = arith.constant 0 : i32
    %c0_i32_0 = arith.constant 0 : i32
    %c0_i32_1 = arith.constant 0 : i32
    return %c0_i32, %c0_i32_0 : i32, i32
  }
  func.func @transform_4(%arg0: i32) -> (i32, i32) {
    %c0_i32 = arith.constant 0 : i32
    %c0_i32_0 = arith.constant 0 : i32
    %c0_i32_1 = arith.constant 0 : i32
    return %c0_i32, %c0_i32_0 : i32, i32
  }
  func.func @transform_5(%arg0: i32) -> (i32, i32) {
    %c0_i32 = arith.constant 0 : i32
    %c0_i32_0 = arith.constant 0 : i32
    %c0_i32_1 = arith.constant 0 : i32
    return %c0_i32, %c0_i32_0 : i32, i32
  }
  func.func @transform_6(%arg0: i32) -> i32 {
    %c0_i32 = arith.constant 0 : i32
    %c0_i32_0 = arith.constant 0 : i32
    return %c0_i32 : i32
  }
  func.func @transform_7(%arg0: i32) -> (i32, i32) {
    %c0_i32 = arith.constant 0 : i32
    %c0_i32_0 = arith.constant 0 : i32
    return %arg0, %c0_i32 : i32, i32
  }
}

</mosaic_0001>

<llo_original>
// kernel: tpu_custom_call.1
$region0: #{tpu_custom_call.1}
  #allocation0 [shape = 'u32[]', space=smem, size = 0x4, offset = 0x4, fixed_abs, tag = 'smem constant byte address 0x4 - core index']
  #allocation1 [shape = 'u32[144,128]{1,0:T(1,128)}', space=vmem, size = 0x12000, scoped, tag = 'internal scratch']
  #allocation2 [shape = 'f32[1]{0:T(128)S(6)}', space=smem, size = 0x200, scoped, tag = 'scoped memory for tpu_custom_call.1']
  %s0 = inlined_call_operand.vmem [shape: f32[128,60], index: 0, kind: input, shape index: {}]
  %s1 = inlined_call_operand.vmem [shape: bf16[60,128], index: 1, kind: input, shape index: {}]
  %s2 = inlined_call_operand.vmem [shape: f32[1,128], index: 2, kind: input, shape index: {}]
  %s3 = inlined_call_operand.vmem [shape: bf16[128,64], index: 3, kind: input, shape index: {}]
  %s4 = inlined_call_operand.vmem [shape: f32[1,64], index: 4, kind: input, shape index: {}]
  %s5 = inlined_call_operand.vmem [shape: f32[1,64], index: 5, kind: input, shape index: {}]
  %s6 = inlined_call_operand.<no memory space> [shape: f32[1], index: 6, kind: input, shape index: {}]
  %s7 = inlined_call_operand.hbm [shape: f32[1,128], index: 7, kind: output, shape index: {}]
  %s8 = sld [smem:[#allocation0]]
  $region38: #{tpu_custom_call.1} parent=0
    _
  %s10 = ssub.s32 1, %s8
  %s11 = scalar_select 0, %s10, %s8
  %12 = sst [smem:[#allocation2]] %s6
  $region1: #{tpu_custom_call.1} parent=0
    #allocation3 [shape = 'u8[512]{0}', space=vmem, size = 0x400, scoped, tag = 'output window, operand 0, single buffered']
    #allocation4 [shape = 's32[1]{0}', space=sflag, size = 0x4, scoped, tag = 'scoped memory for tpu_custom_call.1']
    %13 = vsyncpa [#allocation4], 0
    // Predicated region
    $region2: #{tpu_custom_call.1} parent=1 // pred_check
      _
    $region3: #{tpu_custom_call.1} parent=1 // pred_check_branch
      %15 = sbr.rel (0) target = $region5
    $region4: #{tpu_custom_call.1} parent=1 // pred_region
      _
    $region5: #{tpu_custom_call.1} parent=1 // pred_fallthru
      _
    // Predicated region
    $region6: #{tpu_custom_call.1} parent=1 // pred_check
      _
    $region7: #{tpu_custom_call.1} parent=1 // pred_check_branch
      %17 = sbr.rel (0) target = $region9
    $region8: #{tpu_custom_call.1} parent=1 // pred_region
      _
    $region9: #{tpu_custom_call.1} parent=1 // pred_fallthru
      _
    // Predicated region
    $region10: #{tpu_custom_call.1} parent=1 // pred_check
      _
    $region11: #{tpu_custom_call.1} parent=1 // pred_check_branch
      %19 = sbr.rel (0) target = $region13
    $region12: #{tpu_custom_call.1} parent=1 // pred_region
      _
    $region13: #{tpu_custom_call.1} parent=1 // pred_fallthru
      _
    // Predicated region
    $region14: #{tpu_custom_call.1} parent=1 // pred_check
      _
    $region15: #{tpu_custom_call.1} parent=1 // pred_check_branch
      %21 = sbr.rel (0) target = $region17
    $region16: #{tpu_custom_call.1} parent=1 // pred_region
      _
    $region17: #{tpu_custom_call.1} parent=1 // pred_fallthru
      _
    // Predicated region
    $region18: #{tpu_custom_call.1} parent=1 // pred_check
      _
    $region19: #{tpu_custom_call.1} parent=1 // pred_check_branch
      %23 = sbr.rel (0) target = $region21
    $region20: #{tpu_custom_call.1} parent=1 // pred_region
      _
    $region21: #{tpu_custom_call.1} parent=1 // pred_fallthru
      _
    // Predicated region
    $region22: #{tpu_custom_call.1} parent=1 // pred_check
      _
    $region23: #{tpu_custom_call.1} parent=1 // pred_check_branch
      %25 = sbr.rel (0) target = $region25
    $region24: #{tpu_custom_call.1} parent=1 // pred_region
      _
    $region25: #{tpu_custom_call.1} parent=1 // pred_fallthru
      _
    // Predicated region
    $region26: #{tpu_custom_call.1} parent=1 // pred_check
      _
    $region27: #{tpu_custom_call.1} parent=1 // pred_check_branch
      %27 = sbr.rel (0) target = $region29
    $region28: #{tpu_custom_call.1} parent=1 // pred_region
      _
    $region29: #{tpu_custom_call.1} parent=1 // pred_fallthru
      _
    %v29 = vld [vmem:[%s0] sm:$0xff]
    %v30 = vld [vmem:[%s0 + $0x8] sm:$0xff]
    %v31 = vld [vmem:[%s0 + $0x10] sm:$0xff]
    %v32 = vld [vmem:[%s0 + $0x18] sm:$0xff]
    %v33 = vld [vmem:[%s0 + $0x20] sm:$0xff]
    %v34 = vld [vmem:[%s0 + $0x28] sm:$0xff]
    %v35 = vld [vmem:[%s0 + $0x30] sm:$0xff]
    %v36 = vld [vmem:[%s0 + $0x38] sm:$0xff]
    %v37 = vld [vmem:[%s0 + $0x40] sm:$0xff]
    %v38 = vld [vmem:[%s0 + $0x48] sm:$0xff]
    %v39 = vld [vmem:[%s0 + $0x50] sm:$0xff]
    %v40 = vld [vmem:[%s0 + $0x58] sm:$0xff]
    %v41 = vld [vmem:[%s0 + $0x60] sm:$0xff]
    %v42 = vld [vmem:[%s0 + $0x68] sm:$0xff]
    %v43 = vld [vmem:[%s0 + $0x70] sm:$0xff]
    %v44 = vld [vmem:[%s0 + $0x78] sm:$0xff]
    %v45 = vpack.c.bf16 %v30, %v29
    %v46 = vpack.c.bf16 %v32, %v31
    %v47 = vpack.c.bf16 %v34, %v33
    %v48 = vpack.c.bf16 %v36, %v35
    %v49 = vpack.c.bf16 %v38, %v37
    %v50 = vpack.c.bf16 %v40, %v39
    %v51 = vpack.c.bf16 %v42, %v41
    %v52 = vpack.c.bf16 %v44, %v43
    %v53 = vld [vmem:[%s1] sm:$0xf]
    %v54 = vld [vmem:[%s1 + $0x4] sm:$0xf]
    %v55 = vld [vmem:[%s1 + $0x8] sm:$0xf]
    %v56 = vld [vmem:[%s1 + $0xc] sm:$0xf]
    %v57 = vld [vmem:[%s1 + $0x10] sm:$0xf]
    %v58 = vld [vmem:[%s1 + $0x14] sm:$0xf]
    %v59 = vld [vmem:[%s1 + $0x18] sm:$0xf]
    %v60 = vld [vmem:[%s1 + $0x1c] sm:$0x3]
    %v61 = vld [vmem:[%s2] sm:$0x1]
    %v63 = vlaneseq
    %v64 = vshrl.u32 %v63, 7
    %v65 = vsub.s32 0, %v64
    %v66 = vrot.slane %v61, %v65
    %v76 = vunpack.c.l.b16 %v53
    %v77 = vunpack.c.l.b16 %v54
    %v78 = vunpack.c.l.b16 %v55
    %v79 = vunpack.c.l.b16 %v56
    %v80 = vunpack.c.l.b16 %v57
    %v81 = vunpack.c.l.b16 %v58
    %v82 = vunpack.c.l.b16 %v59
    %v83 = vunpack.c.l.b16 %v60
    %v84 = vpack.c.b16 %v77, %v76
    %v85 = vpack.c.b16 %v79, %v78
    %v86 = vpack.c.b16 %v81, %v80
    %v87 = vpack.c.b16 %v83, %v82
    %vm91 = vcmask 490496
    %v93 = vsel %vm91, %v45, 0
    %v96 = vsel %vm91, %v46, 0
    %v99 = vsel %vm91, %v47, 0
    %v102 = vsel %vm91, %v48, 0
    %v105 = vsel %vm91, %v49, 0
    %v108 = vsel %vm91, %v50, 0
    %v111 = vsel %vm91, %v51, 0
    %v114 = vsel %vm91, %v52, 0
    %vm116 = vcmask 1045504
    %v118 = vsel %vm116, %v87, 0
    %120 = vmatprep.subr.bf16.mxu0 0
    %121 = vmatpush1.bf16.msra.mxu0 %v84
    %122 = vmatprep.subr.bf16.mxu0 0
    %123 = vmatpush1.bf16.msra.mxu0 %v85
    %124 = vmatprep.subr.bf16.mxu0 0
    %125 = vmatpush1.bf16.msra.mxu0 %v86
    %126 = vmatprep.subr.bf16.mxu0 0
    %127 = vmatpush1.bf16.msra.mxu0 %v118
    %128 = vmatprep.subr.bf16.mxu0 0
    %129 = vmatpush1.bf16.msra.mxu0 0
    %130 = vmatprep.subr.bf16.mxu0 0
    %131 = vmatpush1.bf16.msra.mxu0 0
    %132 = vmatprep.subr.bf16.mxu0 0
    %133 = vmatpush1.bf16.msra.mxu0 0
    %134 = vmatprep.subr.bf16.mxu0 0
    %135 = vmatpush1.bf16.msra.mxu0 0
    %136 = vmatprep.subr.bf16.mxu0 0
    %137 = vmatpush1.bf16.msra.mxu0 0
    %138 = vmatprep.subr.bf16.mxu0 0
    %139 = vmatpush1.bf16.msra.mxu0 0
    %140 = vmatprep.subr.bf16.mxu0 0
    %141 = vmatpush1.bf16.msra.mxu0 0
    %142 = vmatprep.subr.bf16.mxu0 0
    %143 = vmatpush1.bf16.msra.mxu0 0
    %144 = vmatprep.subr.bf16.mxu0 0
    %145 = vmatpush1.bf16.msra.mxu0 0
    %146 = vmatprep.subr.bf16.mxu0 0
    %147 = vmatpush1.bf16.msra.mxu0 0
    %148 = vmatprep.subr.bf16.mxu0 0
    %149 = vmatpush1.bf16.msra.mxu0 0
    %150 = vmatprep.subr.bf16.mxu0 0
    %151 = vmatpush1.bf16.msra.mxu0 0
    %152 = vmatprep.mubr.bf16.mxu0 0
    %153 = vmatmul.mubr.bf16.gmra.mrb[0].mxu0 %v93
    %v154 = vpop.f32.mrb[0].mxu0
    %v155 = vadd.f32 %v66, %v154
    %v156 = vpop.f32.mrb[0].mxu0
    %v157 = vpop.f32.mrb[0].mxu0
    %v158 = vadd.f32 %v66, %v157
    %v159 = vpop.f32.mrb[0].mxu0
    %160 = vmatprep.mubr.bf16.mxu0 0
    %161 = vmatmul.mubr.bf16.gmra.mrb[0].mxu0 %v96
    %v162 = vpop.f32.mrb[0].mxu0
    %v163 = vadd.f32 %v66, %v162
    %v164 = vpop.f32.mrb[0].mxu0
    %v165 = vpop.f32.mrb[0].mxu0
    %v166 = vadd.f32 %v66, %v165
    %v167 = vpop.f32.mrb[0].mxu0
    %168 = vmatprep.mubr.bf16.mxu0 0
    %169 = vmatmul.mubr.bf16.gmra.mrb[0].mxu0 %v99
    %v170 = vpop.f32.mrb[0].mxu0
    %v171 = vadd.f32 %v66, %v170
    %v172 = vpop.f32.mrb[0].mxu0
    %v173 = vpop.f32.mrb[0].mxu0
    %v174 = vadd.f32 %v66, %v173
    %v175 = vpop.f32.mrb[0].mxu0
    %176 = vmatprep.mubr.bf16.mxu0 0
    %177 = vmatmul.mubr.bf16.gmra.mrb[0].mxu0 %v102
    %v178 = vpop.f32.mrb[0].mxu0
    %v179 = vadd.f32 %v66, %v178
    %v180 = vpop.f32.mrb[0].mxu0
    %v181 = vpop.f32.mrb[0].mxu0
    %v182 = vadd.f32 %v66, %v181
    %v183 = vpop.f32.mrb[0].mxu0
    %184 = vmatprep.mubr.bf16.mxu0 0
    %185 = vmatmul.mubr.bf16.gmra.mrb[0].mxu0 %v105
    %v186 = vpop.f32.mrb[0].mxu0
    %v187 = vadd.f32 %v66, %v186
    %v188 = vpop.f32.mrb[0].mxu0
    %v189 = vpop.f32.mrb[0].mxu0
    %v190 = vadd.f32 %v66, %v189
    %v191 = vpop.f32.mrb[0].mxu0
    %192 = vmatprep.mubr.bf16.mxu0 0
    %193 = vmatmul.mubr.bf16.gmra.mrb[0].mxu0 %v108
    %v194 = vpop.f32.mrb[0].mxu0
    %v195 = vadd.f32 %v66, %v194
    %v196 = vpop.f32.mrb[0].mxu0
    %v197 = vpop.f32.mrb[0].mxu0
    %v198 = vadd.f32 %v66, %v197
    %v199 = vpop.f32.mrb[0].mxu0
    %200 = vmatprep.mubr.bf16.mxu0 0
    %201 = vmatmul.mubr.bf16.gmra.mrb[0].mxu0 %v111
    %v202 = vpop.f32.mrb[0].mxu0
    %v203 = vadd.f32 %v66, %v202
    %v204 = vpop.f32.mrb[0].mxu0
    %v205 = vpop.f32.mrb[0].mxu0
    %v206 = vadd.f32 %v66, %v205
    %v207 = vpop.f32.mrb[0].mxu0
    %208 = vmatprep.mubr.bf16.mxu0 0
    %209 = vmatmul.mubr.bf16.gmra.mrb[0].mxu0 %v114
    %v210 = vpop.f32.mrb[0].mxu0
    %v211 = vadd.f32 %v66, %v210
    %v212 = vpop.f32.mrb[0].mxu0
    %v213 = vpop.f32.mrb[0].mxu0
    %v214 = vadd.f32 %v66, %v213
    %v215 = vpop.f32.mrb[0].mxu0
    %216 = vdwg.mxu0
    %v217 = vmax.f32 %v155, 0.0
    %v218 = vmax.f32 %v158, 0.0
    %v219 = vmax.f32 %v163, 0.0
    %v220 = vmax.f32 %v166, 0.0
    %v221 = vmax.f32 %v171, 0.0
    %v222 = vmax.f32 %v174, 0.0
    %v223 = vmax.f32 %v179, 0.0
    %v224 = vmax.f32 %v182, 0.0
    %v225 = vmax.f32 %v187, 0.0
    %v226 = vmax.f32 %v190, 0.0
    %v227 = vmax.f32 %v195, 0.0
    %v228 = vmax.f32 %v198, 0.0
    %v229 = vmax.f32 %v203, 0.0
    %v230 = vmax.f32 %v206, 0.0
    %v231 = vmax.f32 %v211, 0.0
    %v232 = vmax.f32 %v214, 0.0
    %v233 = vpack.c.bf16 %v218, %v217
    %v234 = vpack.c.bf16 %v220, %v219
    %v235 = vpack.c.bf16 %v222, %v221
    %v236 = vpack.c.bf16 %v224, %v223
    %v237 = vpack.c.bf16 %v226, %v225
    %v238 = vpack.c.bf16 %v228, %v227
    %v239 = vpack.c.bf16 %v230, %v229
    %v240 = vpack.c.bf16 %v232, %v231
    %v241 = vld [vmem:[%s3] sm:$0xf]
    %v242 = vld [vmem:[%s3 + $0x4] sm:$0xf]
    %v243 = vld [vmem:[%s3 + $0x8] sm:$0xf]
    %v244 = vld [vmem:[%s3 + $0xc] sm:$0xf]
    %v245 = vld [vmem:[%s3 + $0x10] sm:$0xf]
    %v246 = vld [vmem:[%s3 + $0x14] sm:$0xf]
    %v247 = vld [vmem:[%s3 + $0x18] sm:$0xf]
    %v248 = vld [vmem:[%s3 + $0x1c] sm:$0xf]
    %v249 = vld [vmem:[%s3 + $0x20] sm:$0xf]
    %v250 = vld [vmem:[%s3 + $0x24] sm:$0xf]
    %v251 = vld [vmem:[%s3 + $0x28] sm:$0xf]
    %v252 = vld [vmem:[%s3 + $0x2c] sm:$0xf]
    %v253 = vld [vmem:[%s3 + $0x30] sm:$0xf]
    %v254 = vld [vmem:[%s3 + $0x34] sm:$0xf]
    %v255 = vld [vmem:[%s3 + $0x38] sm:$0xf]
    %v256 = vld [vmem:[%s3 + $0x3c] sm:$0xf]
    %v257 = vld [vmem:[%s4] sm:$0x1]
    %v259 = vlaneseq
    %v260 = vshrl.u32 %v259, 7
    %v261 = vsub.s32 0, %v260
    %v262 = vrot.slane %v257, %v261
    %v280 = vunpack.c.l.b16 %v241
    %v281 = vunpack.c.l.b16 %v242
    %v282 = vunpack.c.l.b16 %v243
    %v283 = vunpack.c.l.b16 %v244
    %v284 = vunpack.c.l.b16 %v245
    %v285 = vunpack.c.l.b16 %v246
    %v286 = vunpack.c.l.b16 %v247
    %v287 = vunpack.c.l.b16 %v248
    %v288 = vunpack.c.l.b16 %v249
    %v289 = vunpack.c.l.b16 %v250
    %v290 = vunpack.c.l.b16 %v251
    %v291 = vunpack.c.l.b16 %v252
    %v292 = vunpack.c.l.b16 %v253
    %v293 = vunpack.c.l.b16 %v254
    %v294 = vunpack.c.l.b16 %v255
    %v295 = vunpack.c.l.b16 %v256
    %v296 = vpack.c.b16 %v281, %v280
    %v297 = vpack.c.b16 %v283, %v282
    %v298 = vpack.c.b16 %v285, %v284
    %v299 = vpack.c.b16 %v287, %v286
    %v300 = vpack.c.b16 %v289, %v288
    %v301 = vpack.c.b16 %v291, %v290
    %v302 = vpack.c.b16 %v293, %v292
    %v303 = vpack.c.b16 %v295, %v294
    %312 = vmatprep.subr.bf16.mxu0 0
    %313 = vmatpush1.bf16.msra.mxu0 %v296
    %314 = vmatprep.subr.bf16.mxu0 0
    %315 = vmatpush1.bf16.msra.mxu0 %v297
    %316 = vmatprep.subr.bf16.mxu0 0
    %317 = vmatpush1.bf16.msra.mxu0 %v298
    %318 = vmatprep.subr.bf16.mxu0 0
    %319 = vmatpush1.bf16.msra.mxu0 %v299
    %320 = vmatprep.subr.bf16.mxu0 0
    %321 = vmatpush1.bf16.msra.mxu0 %v300
    %322 = vmatprep.subr.bf16.mxu0 0
    %323 = vmatpush1.bf16.msra.mxu0 %v301
    %324 = vmatprep.subr.bf16.mxu0 0
    %325 = vmatpush1.bf16.msra.mxu0 %v302
    %326 = vmatprep.subr.bf16.mxu0 0
    %327 = vmatpush1.bf16.msra.mxu0 %v303
    %328 = vmatprep.subr.bf16.mxu0 0
    %329 = vmatpush1.bf16.msra.mxu0 0
    %330 = vmatprep.subr.bf16.mxu0 0
    %331 = vmatpush1.bf16.msra.mxu0 0
    %332 = vmatprep.subr.bf16.mxu0 0
    %333 = vmatpush1.bf16.msra.mxu0 0
    %334 = vmatprep.subr.bf16.mxu0 0
    %335 = vmatpush1.bf16.msra.mxu0 0
    %336 = vmatprep.subr.bf16.mxu0 0
    %337 = vmatpush1.bf16.msra.mxu0 0
    %338 = vmatprep.subr.bf16.mxu0 0
    %339 = vmatpush1.bf16.msra.mxu0 0
    %340 = vmatprep.subr.bf16.mxu0 0
    %341 = vmatpush1.bf16.msra.mxu0 0
    %342 = vmatprep.subr.bf16.mxu0 0
    %343 = vmatpush1.bf16.msra.mxu0 0
    %344 = vmatprep.mubr.bf16.mxu0 0
    %345 = vmatmul.mubr.bf16.gmra.mrb[0].mxu0 %v233
    %v346 = vpop.f32.mrb[0].mxu0
    %v347 = vadd.f32 %v262, %v346
    %v348 = vpop.f32.mrb[0].mxu0
    %v349 = vpop.f32.mrb[0].mxu0
    %v350 = vadd.f32 %v262, %v349
    %v351 = vpop.f32.mrb[0].mxu0
    %352 = vmatprep.mubr.bf16.mxu0 0
    %353 = vmatmul.mubr.bf16.gmra.mrb[0].mxu0 %v234
    %v354 = vpop.f32.mrb[0].mxu0
    %v355 = vadd.f32 %v262, %v354
    %v356 = vpop.f32.mrb[0].mxu0
    %v357 = vpop.f32.mrb[0].mxu0
    %v358 = vadd.f32 %v262, %v357
    %v359 = vpop.f32.mrb[0].mxu0
    %360 = vmatprep.mubr.bf16.mxu0 0
    %361 = vmatmul.mubr.bf16.gmra.mrb[0].mxu0 %v235
    %v362 = vpop.f32.mrb[0].mxu0
    %v363 = vadd.f32 %v262, %v362
    %v364 = vpop.f32.mrb[0].mxu0
    %v365 = vpop.f32.mrb[0].mxu0
    %v366 = vadd.f32 %v262, %v365
    %v367 = vpop.f32.mrb[0].mxu0
    %368 = vmatprep.mubr.bf16.mxu0 0
    %369 = vmatmul.mubr.bf16.gmra.mrb[0].mxu0 %v236
    %v370 = vpop.f32.mrb[0].mxu0
    %v371 = vadd.f32 %v262, %v370
    %v372 = vpop.f32.mrb[0].mxu0
    %v373 = vpop.f32.mrb[0].mxu0
    %v374 = vadd.f32 %v262, %v373
    %v375 = vpop.f32.mrb[0].mxu0
    %376 = vmatprep.mubr.bf16.mxu0 0
    %377 = vmatmul.mubr.bf16.gmra.mrb[0].mxu0 %v237
    %v378 = vpop.f32.mrb[0].mxu0
    %v379 = vadd.f32 %v262, %v378
    %v380 = vpop.f32.mrb[0].mxu0
    %v381 = vpop.f32.mrb[0].mxu0
    %v382 = vadd.f32 %v262, %v381
    %v383 = vpop.f32.mrb[0].mxu0
    %384 = vmatprep.mubr.bf16.mxu0 0
    %385 = vmatmul.mubr.bf16.gmra.mrb[0].mxu0 %v238
    %v386 = vpop.f32.mrb[0].mxu0
    %v387 = vadd.f32 %v262, %v386
    %v388 = vpop.f32.mrb[0].mxu0
    %v389 = vpop.f32.mrb[0].mxu0
    %v390 = vadd.f32 %v262, %v389
    %v391 = vpop.f32.mrb[0].mxu0
    %392 = vmatprep.mubr.bf16.mxu0 0
    %393 = vmatmul.mubr.bf16.gmra.mrb[0].mxu0 %v239
    %v394 = vpop.f32.mrb[0].mxu0
    %v395 = vadd.f32 %v262, %v394
    %v396 = vpop.f32.mrb[0].mxu0
    %v397 = vpop.f32.mrb[0].mxu0
    %v398 = vadd.f32 %v262, %v397
    %v399 = vpop.f32.mrb[0].mxu0
    %400 = vmatprep.mubr.bf16.mxu0 0
    %401 = vmatmul.mubr.bf16.gmra.mrb[0].mxu0 %v240
    %v402 = vpop.f32.mrb[0].mxu0
    %v403 = vadd.f32 %v262, %v402
    %v404 = vpop.f32.mrb[0].mxu0
    %v405 = vpop.f32.mrb[0].mxu0
    %v406 = vadd.f32 %v262, %v405
    %v407 = vpop.f32.mrb[0].mxu0
    %408 = vdwg.mxu0
    %v409 = vmax.f32 %v347, 0.0
    %v410 = vmax.f32 %v350, 0.0
    %v411 = vmax.f32 %v355, 0.0
    %v412 = vmax.f32 %v358, 0.0
    %v413 = vmax.f32 %v363, 0.0
    %v414 = vmax.f32 %v366, 0.0
    %v415 = vmax.f32 %v371, 0.0
    %v416 = vmax.f32 %v374, 0.0
    %v417 = vmax.f32 %v379, 0.0
    %v418 = vmax.f32 %v382, 0.0
    %v419 = vmax.f32 %v387, 0.0
    %v420 = vmax.f32 %v390, 0.0
    %v421 = vmax.f32 %v395, 0.0
    %v422 = vmax.f32 %v398, 0.0
    %v423 = vmax.f32 %v403, 0.0
    %v424 = vmax.f32 %v406, 0.0
    %v425 = vld [vmem:[%s5] sm:$0x1]
    %v427 = vlaneseq
    %v428 = vshrl.u32 %v427, 7
    %v429 = vsub.s32 0, %v428
    %v430 = vrot.slane %v425, %v429
    %v432 = vmul.f32 %v409, %v430
    %v433 = vmul.f32 %v410, %v430
    %v434 = vmul.f32 %v411, %v430
    %v435 = vmul.f32 %v412, %v430
    %v436 = vmul.f32 %v413, %v430
    %v437 = vmul.f32 %v414, %v430
    %v438 = vmul.f32 %v415, %v430
    %v439 = vmul.f32 %v416, %v430
    %v440 = vmul.f32 %v417, %v430
    %v441 = vmul.f32 %v418, %v430
    %v442 = vmul.f32 %v419, %v430
    %v443 = vmul.f32 %v420, %v430
    %v444 = vmul.f32 %v421, %v430
    %v445 = vmul.f32 %v422, %v430
    %v446 = vmul.f32 %v423, %v430
    %v447 = vmul.f32 %v424, %v430
    %vm448 = vcmask 523264
    %v449 = vsel %vm448, %v432, 0.0
    %450 = vadd.xlane.f32.xlu0 %v449
    %v451 = vpop.xlane.xlu0 %450
    %v452 = vsel %vm448, %v433, 0.0
    %453 = vadd.xlane.f32.xlu0 %v452
    %v454 = vpop.xlane.xlu0 %453
    %v455 = vsel %vm448, %v434, 0.0
    %456 = vadd.xlane.f32.xlu0 %v455
    %v457 = vpop.xlane.xlu0 %456
    %v458 = vsel %vm448, %v435, 0.0
    %459 = vadd.xlane.f32.xlu0 %v458
    %v460 = vpop.xlane.xlu0 %459
    %v461 = vsel %vm448, %v436, 0.0
    %462 = vadd.xlane.f32.xlu0 %v461
    %v463 = vpop.xlane.xlu0 %462
    %v464 = vsel %vm448, %v437, 0.0
    %465 = vadd.xlane.f32.xlu0 %v464
    %v466 = vpop.xlane.xlu0 %465
    %v467 = vsel %vm448, %v438, 0.0
    %468 = vadd.xlane.f32.xlu0 %v467
    %v469 = vpop.xlane.xlu0 %468
    %v470 = vsel %vm448, %v439, 0.0
    %471 = vadd.xlane.f32.xlu0 %v470
    %v472 = vpop.xlane.xlu0 %471
    %v473 = vsel %vm448, %v440, 0.0
    %474 = vadd.xlane.f32.xlu0 %v473
    %v475 = vpop.xlane.xlu0 %474
    %v476 = vsel %vm448, %v441, 0.0
    %477 = vadd.xlane.f32.xlu0 %v476
    %v478 = vpop.xlane.xlu0 %477
    %v479 = vsel %vm448, %v442, 0.0
    %480 = vadd.xlane.f32.xlu0 %v479
    %v481 = vpop.xlane.xlu0 %480
    %v482 = vsel %vm448, %v443, 0.0
    %483 = vadd.xlane.f32.xlu0 %v482
    %v484 = vpop.xlane.xlu0 %483
    %v485 = vsel %vm448, %v444, 0.0
    %486 = vadd.xlane.f32.xlu0 %v485
    %v487 = vpop.xlane.xlu0 %486
    %v488 = vsel %vm448, %v445, 0.0
    %489 = vadd.xlane.f32.xlu0 %v488
    %v490 = vpop.xlane.xlu0 %489
    %v491 = vsel %vm448, %v446, 0.0
    %492 = vadd.xlane.f32.xlu0 %v491
    %v493 = vpop.xlane.xlu0 %492
    %v494 = vsel %vm448, %v447, 0.0
    %495 = vadd.xlane.f32.xlu0 %v494
    %v496 = vpop.xlane.xlu0 %495
    %s497 = sld [smem:[#allocation2]]
    %v498 = vstv %s497
    %v499 = vadd.f32 %v451, %v498
    %v500 = vadd.f32 %v454, %v498
    %v501 = vadd.f32 %v457, %v498
    %v502 = vadd.f32 %v460, %v498
    %v503 = vadd.f32 %v463, %v498
    %v504 = vadd.f32 %v466, %v498
    %v505 = vadd.f32 %v469, %v498
    %v506 = vadd.f32 %v472, %v498
    %v507 = vadd.f32 %v475, %v498
    %v508 = vadd.f32 %v478, %v498
    %v509 = vadd.f32 %v481, %v498
    %v510 = vadd.f32 %v484, %v498
    %v511 = vadd.f32 %v487, %v498
    %v512 = vadd.f32 %v490, %v498
    %v513 = vadd.f32 %v493, %v498
    %v514 = vadd.f32 %v496, %v498
    %v531 = vlaneseq
    %v532 = vand.u32 %v531, 127
    %v533 = vlaneseq
    %v534 = vshrl.u32 %v533, 7
    %v535 = vsub.s32 %v532, %v534
    %v536 = vrot.slane %v499, %v535
    %v537 = vadd.s32 %v532, 4294967288
    %v538 = vlaneseq
    %v539 = vshrl.u32 %v538, 7
    %v540 = vsub.s32 %v537, %v539
    %v541 = vrot.slane %v500, %v540
    %vm542 = vcmask 130112
    %v543 = vsel %vm542, %v541, %v536
    %v544 = vadd.s32 %v532, 4294967280
    %v545 = vlaneseq
    %v546 = vshrl.u32 %v545, 7
    %v547 = vsub.s32 %v544, %v546
    %v548 = vrot.slane %v501, %v547
    %vm549 = vcmask 195712
    %v550 = vsel %vm549, %v548, %v543
    %v551 = vadd.s32 %v532, 4294967272
    %v552 = vlaneseq
    %v553 = vshrl.u32 %v552, 7
    %v554 = vsub.s32 %v551, %v553
    %v555 = vrot.slane %v502, %v554
    %vm556 = vcmask 261312
    %v557 = vsel %vm556, %v555, %v550
    %v558 = vadd.s32 %v532, 4294967264
    %v559 = vlaneseq
    %v560 = vshrl.u32 %v559, 7
    %v561 = vsub.s32 %v558, %v560
    %v562 = vrot.slane %v503, %v561
    %vm563 = vcmask 326912
    %v564 = vsel %vm563, %v562, %v557
    %v565 = vadd.s32 %v532, 4294967256
    %v566 = vlaneseq
    %v567 = vshrl.u32 %v566, 7
    %v568 = vsub.s32 %v565, %v567
    %v569 = vrot.slane %v504, %v568
    %vm570 = vcmask 392512
    %v571 = vsel %vm570, %v569, %v564
    %v572 = vadd.s32 %v532, 4294967248
    %v573 = vlaneseq
    %v574 = vshrl.u32 %v573, 7
    %v575 = vsub.s32 %v572, %v574
    %v576 = vrot.slane %v505, %v575
    %vm577 = vcmask 458112
    %v578 = vsel %vm577, %v576, %v571
    %v579 = vadd.s32 %v532, 4294967240
    %v580 = vlaneseq
    %v581 = vshrl.u32 %v580, 7
    %v582 = vsub.s32 %v579, %v581
    %v583 = vrot.slane %v506, %v582
    %vm584 = vcmask 523712
    %v585 = vsel %vm584, %v583, %v578
    %v586 = vadd.s32 %v532, 4294967232
    %v587 = vlaneseq
    %v588 = vshrl.u32 %v587, 7
    %v589 = vsub.s32 %v586, %v588
    %v590 = vrot.slane %v507, %v589
    %vm591 = vcmask 589312
    %v592 = vsel %vm591, %v590, %v585
    %v593 = vadd.s32 %v532, 4294967224
    %v594 = vlaneseq
    %v595 = vshrl.u32 %v594, 7
    %v596 = vsub.s32 %v593, %v595
    %v597 = vrot.slane %v508, %v596
    %vm598 = vcmask 654912
    %v599 = vsel %vm598, %v597, %v592
    %v600 = vadd.s32 %v532, 4294967216
    %v601 = vlaneseq
    %v602 = vshrl.u32 %v601, 7
    %v603 = vsub.s32 %v600, %v602
    %v604 = vrot.slane %v509, %v603
    %vm605 = vcmask 720512
    %v606 = vsel %vm605, %v604, %v599
    %v607 = vadd.s32 %v532, 4294967208
    %v608 = vlaneseq
    %v609 = vshrl.u32 %v608, 7
    %v610 = vsub.s32 %v607, %v609
    %v611 = vrot.slane %v510, %v610
    %vm612 = vcmask 786112
    %v613 = vsel %vm612, %v611, %v606
    %v614 = vadd.s32 %v532, 4294967200
    %v615 = vlaneseq
    %v616 = vshrl.u32 %v615, 7
    %v617 = vsub.s32 %v614, %v616
    %v618 = vrot.slane %v511, %v617
    %vm619 = vcmask 851712
    %v620 = vsel %vm619, %v618, %v613
    %v621 = vadd.s32 %v532, 4294967192
    %v622 = vlaneseq
    %v623 = vshrl.u32 %v622, 7
    %v624 = vsub.s32 %v621, %v623
    %v625 = vrot.slane %v512, %v624
    %vm626 = vcmask 917312
    %v627 = vsel %vm626, %v625, %v620
    %v628 = vadd.s32 %v532, 4294967184
    %v629 = vlaneseq
    %v630 = vshrl.u32 %v629, 7
    %v631 = vsub.s32 %v628, %v630
    %v632 = vrot.slane %v513, %v631
    %vm633 = vcmask 982912
    %v634 = vsel %vm633, %v632, %v627
    %v635 = vadd.s32 %v532, 4294967176
    %v636 = vlaneseq
    %v637 = vshrl.u32 %v636, 7
    %v638 = vsub.s32 %v635, %v637
    %v639 = vrot.slane %v514, %v638
    %vm640 = vcmask 1048512
    %v641 = vsel %vm640, %v639, %v634
    %643 = vst [vmem:[#allocation3] sm:$0x1] %v641
    // Predicated region
    $region30: #{tpu_custom_call.1} parent=1 // pred_check
      _
    $region31: #{tpu_custom_call.1} parent=1 // pred_check_branch
      %645 = sbr.rel (0) target = $region33
    $region32: #{tpu_custom_call.1} parent=1 // pred_region
      %s647 = ssub.s32 16, 16
      %648 = vsyncadd [#allocation4], %s647
      %s650 = sshll.u32 [#allocation3], 4
      %s651 = int_to_ptr.vmem [resolvable:$true] %s650
      %653 = dma.vmem_to_hbm [thread:$0]  %s651, 16, %s7, [#allocation4]
    $region33: #{tpu_custom_call.1} parent=1 // pred_fallthru
      _
    // Predicated region
    $region34: #{tpu_custom_call.1} parent=1 // pred_check
      _
    $region35: #{tpu_custom_call.1} parent=1 // pred_check_branch
      %655 = sbr.rel (0) target = $region37
    $region36: #{tpu_custom_call.1} parent=1 // pred_region
      %656 = dma.done [#allocation4], 16
    $region37: #{tpu_custom_call.1} parent=1 // pred_fallthru
      _
    %657 = vsyncpa [#allocation4], 1

</llo_original>
